<compile_context>
chip_gen: v7x
topology: tpu7x:2x2x1
jax: 0.10.0
libtpu: 0.0.40
codegen_flags: <defaults>
</compile_context>

<pallas_src>
import math

import jax
import jax.numpy as jnp
from jax import lax
from jax.experimental import pallas as pl
from jax.experimental.pallas import tpu as pltpu


def _round_up(x, m):
    return ((x + m - 1) // m) * m


def critic_kernel(x_ref, w1_ref, b1_ref, w2_ref, b2_ref, w3_ref, b3_ref, o_ref):
    """One batch tile of the critic MLP, computed feature-major (batch on lanes).

    x_ref  : (TB, S)      natural-layout state tile, f32 (streamed / pipelined)
    w1_ref : (H_pad, S)   bf16 (VMEM-resident)
    b1_ref : (H_pad, 1)   f32
    w2_ref : (H_pad, H_pad) bf16
    b2_ref : (H_pad, 1)   f32
    w3_ref : (H_pad, 1)   f32 value-head weights as a column
    b3_ref : (1,)         f32 scalar in SMEM
    o_ref  : (1, TB)      lane-dense value row for this tile
    """
    # VPU cast (cheap, hidden under MXU/DMA); keeps the HBM stream at minimal f32 bytes.
    x_bf = x_ref[...].astype(jnp.bfloat16)                               # (TB, S)

    # Layer 1, feature-major: contract the state axes of W1 (H,S) and x (TB,S) -> (H, TB).
    h1 = lax.dot_general(
        w1_ref[...], x_bf,
        dimension_numbers=(((1,), (1,)), ((), ())),
        preferred_element_type=jnp.float32,
    )
    h1 = jnp.maximum(h1 + b1_ref[...], 0.0)                              # (H_pad, TB) f32

    # Layer 2: standard NN matmul, bf16 MXU inputs, f32 accumulate.
    h2 = jnp.dot(w2_ref[...], h1.astype(jnp.bfloat16),
                 preferred_element_type=jnp.float32)
    h2 = jnp.maximum(h2 + b2_ref[...], 0.0)                              # (H_pad, TB) f32

    # Value head: VPU multiply + sublane (XLU) reduce instead of an N=1 MXU matmul.
    v = jnp.sum(h2 * w3_ref[...], axis=0, keepdims=True) + b3_ref[0]     # (1, TB) f32
    o_ref[...] = v.astype(o_ref.dtype)


def pack_critic_params(params):
    """PyTorch-layout params -> padded, kernel-layout params (done once).

    Hidden ("row") axes are padded only to a multiple of 16 (covers the f32 sublane
    granule of 8 and bf16 packing of 16) -- lane-facing axes use full-dim blocks so they
    need no 128-padding.  Zero padding is exact: padded hidden units stay 0 through ReLU
    and contribute 0 to the value head.
    """
    w1, b1, w2, b2, w3, b3 = params            # torch layout: W (out, in), b (out,)
    hidden_dim, state_dim = w1.shape
    h_pad = _round_up(hidden_dim, 16)
    dh = h_pad - hidden_dim
    w1k = jnp.pad(w1, ((0, dh), (0, 0))).astype(jnp.bfloat16)    # (H_pad, S)     bf16 MXU
    b1k = jnp.pad(b1, (0, dh)).reshape(h_pad, 1)                 # (H_pad, 1)     f32 VPU
    w2k = jnp.pad(w2, ((0, dh), (0, dh))).astype(jnp.bfloat16)   # (H_pad, H_pad) bf16 MXU
    b2k = jnp.pad(b2, (0, dh)).reshape(h_pad, 1)                 # (H_pad, 1)     f32 VPU
    w3k = jnp.pad(w3.T, ((0, dh), (0, 0))).astype(jnp.float32)   # (H_pad, 1)     f32 VPU
    b3k = b3.reshape(1).astype(jnp.float32)                      # (1,)           SMEM scalar
    return (w1k, b1k, w2k, b2k, w3k, b3k)


def _choose_batch_tile(batch, h_pad):
    """Batch-tile heuristic (perf review):
      * tiny batches: a single 128-lane tile,
      * rollout-sized batches: >=256-wide tiles (full 256-lane MXU N on v6e/v7x), up to
        2048 to amortize the ~0.35us per-grid-step overhead,
      * keep >=2 tiles so the "parallel" grid axis spans both v7x TensorCores,
      * cap so the f32 h1/h2 intermediates (2*H_pad*TB*4 B) stay well inside v7x VMEM.
    """
    if batch <= 128:
        return 128
    if batch <= 512:
        return 256
    cap_vmem = max(256, ((16 * 1024 * 1024) // (2 * h_pad * 4)) // 128 * 128)
    half = _round_up(pl.cdiv(batch, 2), 128)          # >= 2 grid steps (v7x megacore)
    return max(256, min(2048, cap_vmem, half))


def _nbytes(a):
    return int(a.size) * a.dtype.itemsize


def critic_forward(state, packed_params, *, block_batch=None):
    """state: (batch, state_dim) float32. Returns value: (batch, 1) float32."""
    w1k, b1k, w2k, b2k, w3k, b3k = packed_params
    batch, state_dim = state.shape
    h_pad = w1k.shape[0]

    if block_batch is None:
        tb = _choose_batch_tile(batch, h_pad)
    else:
        tb = max(128, _round_up(block_batch, 128))
    batch_p = _round_up(batch, tb)
    grid = (batch_p // tb,)

    # Only the batch axis is (cheaply) zero-padded; no feature padding, no transpose.
    x = jnp.pad(state, ((0, batch_p - batch), (0, 0)))            # (batch_p, S)

    # VMEM budget derived from the actual footprint (weights may be double-buffered by
    # the pipeline, streamed tiles are double-buffered, intermediates are per-step).
    weight_bytes = sum(_nbytes(a) for a in (w1k, b1k, w2k, b2k, w3k))
    stream_bytes = 2 * (tb * state_dim * 4 + 8 * tb * 4)          # in/out tiles, 2 buffers
    interm_bytes = tb * h_pad * 10 + tb * state_dim * 2           # h1,h2 f32 + bf16 casts
    vmem_limit = 2 * weight_bytes + stream_bytes + interm_bytes + 8 * 1024 * 1024
    vmem_limit = int(min(48 * 1024 * 1024, max(32 * 1024 * 1024, vmem_limit)))

    resident = lambda i: (0, 0)   # weights/biases: same block every step -> stay in VMEM
    out = pl.pallas_call(
        critic_kernel,
        out_shape=jax.ShapeDtypeStruct((1, batch_p), jnp.float32),
        grid=grid,
        in_specs=[
            pl.BlockSpec((tb, state_dim), lambda i: (i, 0)),       # state tile (pipelined)
            pl.BlockSpec((h_pad, state_dim), resident),            # W1 (bf16)
            pl.BlockSpec((h_pad, 1), resident),                    # b1
            pl.BlockSpec((h_pad, h_pad), resident),                # W2 (bf16)
            pl.BlockSpec((h_pad, 1), resident),                    # b2
            pl.BlockSpec((h_pad, 1), resident),                    # w3 (column)
            pl.BlockSpec(memory_space=pltpu.MemorySpace.SMEM),     # b3 scalar in SMEM
        ],
        out_specs=pl.BlockSpec((1, tb), lambda i: (0, i)),         # lane-dense value row
        compiler_params=pltpu.CompilerParams(
            dimension_semantics=("parallel",),                     # megacore sharding on v7x
            vmem_limit_bytes=vmem_limit,
        ),
    )(x, w1k, b1k, w2k, b2k, w3k, b3k)

    # (1, batch_p) lane-dense row -> (batch, 1) column, dropping batch padding.
    return out[0, :batch, None]


def init_critic_params(key, state_dim, hidden_dim):
    """PyTorch nn.Linear default init: U[-1/sqrt(fan_in), 1/sqrt(fan_in)], W is (out, in)."""
    keys = jax.random.split(key, 6)

    def linear(kw, kb, fan_in, fan_out):
        bound = 1.0 / math.sqrt(fan_in)
        w = jax.random.uniform(kw, (fan_out, fan_in), jnp.float32, -bound, bound)
        b = jax.random.uniform(kb, (fan_out,), jnp.float32, -bound, bound)
        return w, b

    w1, b1 = linear(keys[0], keys[1], state_dim, hidden_dim)
    w2, b2 = linear(keys[2], keys[3], hidden_dim, hidden_dim)
    w3, b3 = linear(keys[4], keys[5], hidden_dim, 1)
    return (w1, b1, w2, b2, w3, b3)


def reference_forward(state, params):
    """Pure-JAX f32 reference with PyTorch semantics: relu(x @ W.T + b) chain."""
    w1, b1, w2, b2, w3, b3 = params
    h1 = jnp.maximum(state @ w1.T + b1, 0.0)
    h2 = jnp.maximum(h1 @ w2.T + b2, 0.0)
    return h2 @ w3.T + b3


if __name__ == "__main__":
    batch, state_dim, hidden_dim = 8, 16, 32

    key = jax.random.PRNGKey(0)
    k_params, k_state = jax.random.split(key)
    params = init_critic_params(k_params, state_dim, hidden_dim)
    state = jax.random.normal(k_state, (batch, state_dim), jnp.float32)

    packed = pack_critic_params(params)
    value = critic_forward(state, packed)
    jax.block_until_ready(value)

    ref = reference_forward(state, params)
    assert value.shape == (batch, 1)
    # bf16 MXU weight inputs -> compare against the f32 reference at a relaxed tolerance.
    assert jnp.allclose(value, ref, atol=5e-2, rtol=5e-2), "mismatch vs reference"

    print("KERNEL_OK")
</pallas_src>

<mosaic_0001>
module attributes {stable_mosaic.version = 11 : i64} {
  func.func @critic_kernel(%arg0: i32, %arg1: memref<128x16xf32, #tpu.memory_space<vmem>>, %arg2: memref<32x16xbf16, #tpu.memory_space<vmem>>, %arg3: memref<32x1xf32, #tpu.memory_space<vmem>>, %arg4: memref<32x32xbf16, #tpu.memory_space<vmem>>, %arg5: memref<32x1xf32, #tpu.memory_space<vmem>>, %arg6: memref<32x1xf32, #tpu.memory_space<vmem>>, %arg7: memref<1xf32, #tpu.memory_space<smem>>, %arg8: memref<1x128xf32, #tpu.memory_space<vmem>>) attributes {dimension_semantics = [#tpu.dimension_semantics<parallel>], iteration_bounds = array<i64: 1>, scalar_prefetch = 0 : i64, scratch_operands = 0 : i64, tpu.core_type = #tpu.core_type<tc>, window_params = [{transform_indices = @transform_0, window_bounds = array<i64: 128, 16>}, {pipeline_mode = #tpu.pipeline_mode<synchronous>, transform_indices = @transform_1, window_bounds = array<i64: 32, 16>}, {pipeline_mode = #tpu.pipeline_mode<synchronous>, transform_indices = @transform_2, window_bounds = array<i64: 32, 1>}, {pipeline_mode = #tpu.pipeline_mode<synchronous>, transform_indices = @transform_3, window_bounds = array<i64: 32, 32>}, {pipeline_mode = #tpu.pipeline_mode<synchronous>, transform_indices = @transform_4, window_bounds = array<i64: 32, 1>}, {pipeline_mode = #tpu.pipeline_mode<synchronous>, transform_indices = @transform_5, window_bounds = array<i64: 32, 1>}, {transform_indices = @transform_6, window_bounds = array<i64: 1>}, {transform_indices = @transform_7, window_bounds = array<i64: 1, 128>}]} {
    %c0 = arith.constant 0 : index
    %c0_0 = arith.constant 0 : index
    %0 = vector.load %arg1[%c0, %c0_0] : memref<128x16xf32, #tpu.memory_space<vmem>>, vector<128x16xf32>
    %1 = arith.truncf %0 : vector<128x16xf32> to vector<128x16xbf16>
    %c0_1 = arith.constant 0 : index
    %c0_2 = arith.constant 0 : index
    %2 = vector.load %arg2[%c0_1, %c0_2] : memref<32x16xbf16, #tpu.memory_space<vmem>>, vector<32x16xbf16>
    %cst = arith.constant dense<0.000000e+00> : vector<32x128xf32>
    %3 = tpu.matmul %2, %1, %cst {dimension_numbers = #tpu.dot_dimension_numbers<[1], [1], [0], [0], [0, 0, 1, 0], [], []>} : vector<32x16xbf16>, vector<128x16xbf16>, vector<32x128xf32> -> vector<32x128xf32>
    %c0_3 = arith.constant 0 : index
    %c0_4 = arith.constant 0 : index
    %4 = vector.load %arg3[%c0_3, %c0_4] : memref<32x1xf32, #tpu.memory_space<vmem>>, vector<32x1xf32>
    %5 = vector.broadcast %4 : vector<32x1xf32> to vector<32x128xf32>
    %6 = arith.addf %3, %5 : vector<32x128xf32>
    %cst_5 = arith.constant 0.000000e+00 : f32
    %7 = vector.broadcast %cst_5 : f32 to vector<32x128xf32>
    %8 = arith.maximumf %6, %7 : vector<32x128xf32>
    %c0_6 = arith.constant 0 : index
    %c0_7 = arith.constant 0 : index
    %9 = vector.load %arg4[%c0_6, %c0_7] : memref<32x32xbf16, #tpu.memory_space<vmem>>, vector<32x32xbf16>
    %10 = arith.truncf %8 : vector<32x128xf32> to vector<32x128xbf16>
    %cst_8 = arith.constant dense<0.000000e+00> : vector<32x128xf32>
    %11 = tpu.matmul %9, %10, %cst_8 {dimension_numbers = #tpu.dot_dimension_numbers<[1], [0], [0], [1], [0, 0, 1, 1], [], []>} : vector<32x32xbf16>, vector<32x128xbf16>, vector<32x128xf32> -> vector<32x128xf32>
    %c0_9 = arith.constant 0 : index
    %c0_10 = arith.constant 0 : index
    %12 = vector.load %arg5[%c0_9, %c0_10] : memref<32x1xf32, #tpu.memory_space<vmem>>, vector<32x1xf32>
    %13 = vector.broadcast %12 : vector<32x1xf32> to vector<32x128xf32>
    %14 = arith.addf %11, %13 : vector<32x128xf32>
    %cst_11 = arith.constant 0.000000e+00 : f32
    %15 = vector.broadcast %cst_11 : f32 to vector<32x128xf32>
    %16 = arith.maximumf %14, %15 : vector<32x128xf32>
    %c0_12 = arith.constant 0 : index
    %c0_13 = arith.constant 0 : index
    %17 = vector.load %arg6[%c0_12, %c0_13] : memref<32x1xf32, #tpu.memory_space<vmem>>, vector<32x1xf32>
    %18 = vector.broadcast %17 : vector<32x1xf32> to vector<32x128xf32>
    %19 = arith.mulf %16, %18 : vector<32x128xf32>
    %cst_14 = arith.constant dense<0.000000e+00> : vector<128xf32>
    %20 = vector.multi_reduction <add>, %19, %cst_14 [0] : vector<32x128xf32> to vector<128xf32>
    %21 = vector.shape_cast %20 : vector<128xf32> to vector<1x128xf32>
    %c0_15 = arith.constant 0 : index
    %22 = memref.load %arg7[%c0_15] : memref<1xf32, #tpu.memory_space<smem>>
    %23 = vector.broadcast %22 : f32 to vector<1x128xf32>
    %24 = arith.addf %21, %23 : vector<1x128xf32>
    %c0_16 = arith.constant 0 : index
    %c0_17 = arith.constant 0 : index
    %25 = vector.load %arg8[%c0_16, %c0_17] : memref<1x128xf32, #tpu.memory_space<vmem>>, vector<1x128xf32>
    tpu.vector_store %arg8[%c0_16, %c0_17], %24 {strides = array<i32>} : memref<1x128xf32, #tpu.memory_space<vmem>>, vector<1x128xf32>,
    return
  }
  func.func @transform_0(%arg0: i32) -> (i32, i32) {
    %c0_i32 = arith.constant 0 : i32
    %c0_i32_0 = arith.constant 0 : i32
    return %arg0, %c0_i32 : i32, i32
  }
  func.func @transform_1(%arg0: i32) -> (i32, i32) {
    %c0_i32 = arith.constant 0 : i32
    %c0_i32_0 = arith.constant 0 : i32
    %c0_i32_1 = arith.constant 0 : i32
    return %c0_i32, %c0_i32_0 : i32, i32
  }
  func.func @transform_2(%arg0: i32) -> (i32, i32) {
    %c0_i32 = arith.constant 0 : i32
    %c0_i32_0 = arith.constant 0 : i32
    %c0_i32_1 = arith.constant 0 : i32
    return %c0_i32, %c0_i32_0 : i32, i32
  }
  func.func @transform_3(%arg0: i32) -> (i32, i32) {
    %c0_i32 = arith.constant 0 : i32
    %c0_i32_0 = arith.constant 0 : i32
    %c0_i32_1 = arith.constant 0 : i32
    return %c0_i32, %c0_i32_0 : i32, i32
  }
  func.func @transform_4(%arg0: i32) -> (i32, i32) {
    %c0_i32 = arith.constant 0 : i32
    %c0_i32_0 = arith.constant 0 : i32
    %c0_i32_1 = arith.constant 0 : i32
    return %c0_i32, %c0_i32_0 : i32, i32
  }
  func.func @transform_5(%arg0: i32) -> (i32, i32) {
    %c0_i32 = arith.constant 0 : i32
    %c0_i32_0 = arith.constant 0 : i32
    %c0_i32_1 = arith.constant 0 : i32
    return %c0_i32, %c0_i32_0 : i32, i32
  }
  func.func @transform_6(%arg0: i32) -> i32 {
    %c0_i32 = arith.constant 0 : i32
    %c0_i32_0 = arith.constant 0 : i32
    return %c0_i32 : i32
  }
  func.func @transform_7(%arg0: i32) -> (i32, i32) {
    %c0_i32 = arith.constant 0 : i32
    %c0_i32_0 = arith.constant 0 : i32
    return %c0_i32, %arg0 : i32, i32
  }
}

</mosaic_0001>

<llo_original>
// kernel: tpu_custom_call.1
$region0: #{tpu_custom_call.1}
  #allocation0 [shape = 'u32[]', space=smem, size = 0x4, offset = 0x4, fixed_abs, tag = 'smem constant byte address 0x4 - core index']
  #allocation1 [shape = 'u32[144,128]{1,0:T(1,128)}', space=vmem, size = 0x12000, scoped, tag = 'internal scratch']
  #allocation2 [shape = 'f32[1]{0:T(128)S(6)}', space=smem, size = 0x200, scoped, tag = 'scoped memory for tpu_custom_call.1']
  %s0 = inlined_call_operand.vmem [shape: f32[128,16], index: 0, kind: input, shape index: {}]
  %s1 = inlined_call_operand.vmem [shape: bf16[32,16], index: 1, kind: input, shape index: {}]
  %s2 = inlined_call_operand.vmem [shape: f32[32,1], index: 2, kind: input, shape index: {}]
  %s3 = inlined_call_operand.vmem [shape: bf16[32,32], index: 3, kind: input, shape index: {}]
  %s4 = inlined_call_operand.vmem [shape: f32[32,1], index: 4, kind: input, shape index: {}]
  %s5 = inlined_call_operand.vmem [shape: f32[32,1], index: 5, kind: input, shape index: {}]
  %s6 = inlined_call_operand.<no memory space> [shape: f32[1], index: 6, kind: input, shape index: {}]
  %s7 = inlined_call_operand.hbm [shape: f32[1,128], index: 7, kind: output, shape index: {}]
  %s8 = sld [smem:[#allocation0]]
  $region38: #{tpu_custom_call.1} parent=0
    _
  %s10 = ssub.s32 1, %s8
  %s11 = scalar_select 0, %s10, %s8
  %12 = sst [smem:[#allocation2]] %s6
  $region1: #{tpu_custom_call.1} parent=0
    #allocation3 [shape = 'u8[512]{0}', space=vmem, size = 0x400, scoped, tag = 'output window, operand 0, single buffered']
    #allocation4 [shape = 's32[1]{0}', space=sflag, size = 0x4, scoped, tag = 'scoped memory for tpu_custom_call.1']
    %13 = vsyncpa [#allocation4], 0
    // Predicated region
    $region2: #{tpu_custom_call.1} parent=1 // pred_check
      _
    $region3: #{tpu_custom_call.1} parent=1 // pred_check_branch
      %15 = sbr.rel (0) target = $region5
    $region4: #{tpu_custom_call.1} parent=1 // pred_region
      _
    $region5: #{tpu_custom_call.1} parent=1 // pred_fallthru
      _
    // Predicated region
    $region6: #{tpu_custom_call.1} parent=1 // pred_check
      _
    $region7: #{tpu_custom_call.1} parent=1 // pred_check_branch
      %17 = sbr.rel (0) target = $region9
    $region8: #{tpu_custom_call.1} parent=1 // pred_region
      _
    $region9: #{tpu_custom_call.1} parent=1 // pred_fallthru
      _
    // Predicated region
    $region10: #{tpu_custom_call.1} parent=1 // pred_check
      _
    $region11: #{tpu_custom_call.1} parent=1 // pred_check_branch
      %19 = sbr.rel (0) target = $region13
    $region12: #{tpu_custom_call.1} parent=1 // pred_region
      _
    $region13: #{tpu_custom_call.1} parent=1 // pred_fallthru
      _
    // Predicated region
    $region14: #{tpu_custom_call.1} parent=1 // pred_check
      _
    $region15: #{tpu_custom_call.1} parent=1 // pred_check_branch
      %21 = sbr.rel (0) target = $region17
    $region16: #{tpu_custom_call.1} parent=1 // pred_region
      _
    $region17: #{tpu_custom_call.1} parent=1 // pred_fallthru
      _
    // Predicated region
    $region18: #{tpu_custom_call.1} parent=1 // pred_check
      _
    $region19: #{tpu_custom_call.1} parent=1 // pred_check_branch
      %23 = sbr.rel (0) target = $region21
    $region20: #{tpu_custom_call.1} parent=1 // pred_region
      _
    $region21: #{tpu_custom_call.1} parent=1 // pred_fallthru
      _
    // Predicated region
    $region22: #{tpu_custom_call.1} parent=1 // pred_check
      _
    $region23: #{tpu_custom_call.1} parent=1 // pred_check_branch
      %25 = sbr.rel (0) target = $region25
    $region24: #{tpu_custom_call.1} parent=1 // pred_region
      _
    $region25: #{tpu_custom_call.1} parent=1 // pred_fallthru
      _
    // Predicated region
    $region26: #{tpu_custom_call.1} parent=1 // pred_check
      _
    $region27: #{tpu_custom_call.1} parent=1 // pred_check_branch
      %27 = sbr.rel (0) target = $region29
    $region28: #{tpu_custom_call.1} parent=1 // pred_region
      _
    $region29: #{tpu_custom_call.1} parent=1 // pred_fallthru
      _
    %v29 = vld [vmem:[%s0] sm:$0xff]
    %v30 = vld [vmem:[%s0 + $0x8] sm:$0xff]
    %v31 = vld [vmem:[%s0 + $0x10] sm:$0xff]
    %v32 = vld [vmem:[%s0 + $0x18] sm:$0xff]
    %v33 = vld [vmem:[%s0 + $0x20] sm:$0xff]
    %v34 = vld [vmem:[%s0 + $0x28] sm:$0xff]
    %v35 = vld [vmem:[%s0 + $0x30] sm:$0xff]
    %v36 = vld [vmem:[%s0 + $0x38] sm:$0xff]
    %v37 = vld [vmem:[%s0 + $0x40] sm:$0xff]
    %v38 = vld [vmem:[%s0 + $0x48] sm:$0xff]
    %v39 = vld [vmem:[%s0 + $0x50] sm:$0xff]
    %v40 = vld [vmem:[%s0 + $0x58] sm:$0xff]
    %v41 = vld [vmem:[%s0 + $0x60] sm:$0xff]
    %v42 = vld [vmem:[%s0 + $0x68] sm:$0xff]
    %v43 = vld [vmem:[%s0 + $0x70] sm:$0xff]
    %v44 = vld [vmem:[%s0 + $0x78] sm:$0xff]
    %v45 = vpack.c.bf16 %v30, %v29
    %v46 = vpack.c.bf16 %v32, %v31
    %v47 = vpack.c.bf16 %v34, %v33
    %v48 = vpack.c.bf16 %v36, %v35
    %v49 = vpack.c.bf16 %v38, %v37
    %v50 = vpack.c.bf16 %v40, %v39
    %v51 = vpack.c.bf16 %v42, %v41
    %v52 = vpack.c.bf16 %v44, %v43
    %v53 = vld [vmem:[%s1] sm:$0xf]
    %v54 = vld [vmem:[%s1 + $0x4] sm:$0xf]
    %v55 = vld [vmem:[%s1 + $0x8] sm:$0xf]
    %v56 = vld [vmem:[%s1 + $0xc] sm:$0xf]
    %v57 = vld [vmem:[%s2] sm:$0xff]
    %v58 = vld [vmem:[%s2 + $0x8] sm:$0xff]
    %v59 = vld [vmem:[%s2 + $0x10] sm:$0xff]
    %v60 = vld [vmem:[%s2 + $0x18] sm:$0xff]
    %62 = vset.pattern.permute.xlu0 0
    %63 = vperm.xlu0 %62, %v57
    %v64 = vpop.permute.xlu0 %63
    %67 = vset.pattern.permute.xlu0 0
    %68 = vperm.xlu0 %67, %v58
    %v69 = vpop.permute.xlu0 %68
    %72 = vset.pattern.permute.xlu0 0
    %73 = vperm.xlu0 %72, %v59
    %v74 = vpop.permute.xlu0 %73
    %77 = vset.pattern.permute.xlu0 0
    %78 = vperm.xlu0 %77, %v60
    %v79 = vpop.permute.xlu0 %78
    %v85 = vunpack.c.l.b16 %v53
    %v86 = vunpack.c.l.b16 %v54
    %v87 = vunpack.c.l.b16 %v55
    %v88 = vunpack.c.l.b16 %v56
    %v89 = vpack.c.b16 %v86, %v85
    %v90 = vpack.c.b16 %v88, %v87
    %vm91 = vcmask 130048
    %v93 = vsel %vm91, %v89, 0
    %v96 = vsel %vm91, %v90, 0
    %v99 = vsel %vm91, %v45, 0
    %v102 = vsel %vm91, %v46, 0
    %v105 = vsel %vm91, %v47, 0
    %v108 = vsel %vm91, %v48, 0
    %v111 = vsel %vm91, %v49, 0
    %v114 = vsel %vm91, %v50, 0
    %v117 = vsel %vm91, %v51, 0
    %v120 = vsel %vm91, %v52, 0
    %122 = vmatprep.subr.bf16.mxu0 0
    %123 = vmatpush1.bf16.xpose.msra.mxu0 %v99
    %124 = vmatprep.subr.bf16.mxu0 0
    %125 = vmatpush1.bf16.xpose.msra.mxu0 %v102
    %126 = vmatprep.subr.bf16.mxu0 0
    %127 = vmatpush1.bf16.xpose.msra.mxu0 %v105
    %128 = vmatprep.subr.bf16.mxu0 0
    %129 = vmatpush1.bf16.xpose.msra.mxu0 %v108
    %130 = vmatprep.subr.bf16.mxu0 0
    %131 = vmatpush1.bf16.xpose.msra.mxu0 %v111
    %132 = vmatprep.subr.bf16.mxu0 0
    %133 = vmatpush1.bf16.xpose.msra.mxu0 %v114
    %134 = vmatprep.subr.bf16.mxu0 0
    %135 = vmatpush1.bf16.xpose.msra.mxu0 %v117
    %136 = vmatprep.subr.bf16.mxu0 0
    %137 = vmatpush1.bf16.xpose.msra.mxu0 %v120
    %138 = vmatprep.subr.bf16.mxu0 0
    %139 = vmatpush1.bf16.xpose.msra.mxu0 0
    %140 = vmatprep.subr.bf16.mxu0 0
    %141 = vmatpush1.bf16.xpose.msra.mxu0 0
    %142 = vmatprep.subr.bf16.mxu0 0
    %143 = vmatpush1.bf16.xpose.msra.mxu0 0
    %144 = vmatprep.subr.bf16.mxu0 0
    %145 = vmatpush1.bf16.xpose.msra.mxu0 0
    %146 = vmatprep.subr.bf16.mxu0 0
    %147 = vmatpush1.bf16.xpose.msra.mxu0 0
    %148 = vmatprep.subr.bf16.mxu0 0
    %149 = vmatpush1.bf16.xpose.msra.mxu0 0
    %150 = vmatprep.subr.bf16.mxu0 0
    %151 = vmatpush1.bf16.xpose.msra.mxu0 0
    %152 = vmatprep.subr.bf16.mxu0 0
    %153 = vmatpush1.bf16.xpose.msra.mxu0 0
    %154 = vmatprep.mubr.bf16.mxu0 0
    %155 = vmatmul.mubr.bf16.gmra.mrb[0].mxu0 %v93
    %v156 = vpop.f32.mrb[0].mxu0
    %v157 = vadd.f32 %v64, %v156
    %v158 = vpop.f32.mrb[0].mxu0
    %v159 = vpop.f32.mrb[0].mxu0
    %v160 = vadd.f32 %v69, %v159
    %v161 = vpop.f32.mrb[0].mxu0
    %162 = vmatprep.mubr.bf16.mxu0 0
    %163 = vmatmul.mubr.bf16.gmra.mrb[0].mxu0 %v96
    %v164 = vpop.f32.mrb[0].mxu0
    %v165 = vadd.f32 %v74, %v164
    %v166 = vpop.f32.mrb[0].mxu0
    %v167 = vpop.f32.mrb[0].mxu0
    %v168 = vadd.f32 %v79, %v167
    %v169 = vpop.f32.mrb[0].mxu0
    %170 = vdwg.mxu0
    %v171 = vmax.f32 %v157, 0.0
    %v172 = vmax.f32 %v160, 0.0
    %v173 = vmax.f32 %v165, 0.0
    %v174 = vmax.f32 %v168, 0.0
    %v175 = vld [vmem:[%s3] sm:$0xf]
    %v176 = vld [vmem:[%s3 + $0x4] sm:$0xf]
    %v177 = vld [vmem:[%s3 + $0x8] sm:$0xf]
    %v178 = vld [vmem:[%s3 + $0xc] sm:$0xf]
    %v179 = vpack.c.bf16 %v172, %v171
    %v180 = vpack.c.bf16 %v174, %v173
    %v181 = vld [vmem:[%s4] sm:$0xff]
    %v182 = vld [vmem:[%s4 + $0x8] sm:$0xff]
    %v183 = vld [vmem:[%s4 + $0x10] sm:$0xff]
    %v184 = vld [vmem:[%s4 + $0x18] sm:$0xff]
    %186 = vset.pattern.permute.xlu0 0
    %187 = vperm.xlu0 %186, %v181
    %v188 = vpop.permute.xlu0 %187
    %191 = vset.pattern.permute.xlu0 0
    %192 = vperm.xlu0 %191, %v182
    %v193 = vpop.permute.xlu0 %192
    %196 = vset.pattern.permute.xlu0 0
    %197 = vperm.xlu0 %196, %v183
    %v198 = vpop.permute.xlu0 %197
    %201 = vset.pattern.permute.xlu0 0
    %202 = vperm.xlu0 %201, %v184
    %v203 = vpop.permute.xlu0 %202
    %v209 = vunpack.c.l.b16 %v175
    %v210 = vunpack.c.l.b16 %v176
    %v211 = vunpack.c.l.b16 %v177
    %v212 = vunpack.c.l.b16 %v178
    %v213 = vpack.c.b16 %v210, %v209
    %v214 = vpack.c.b16 %v212, %v211
    %vm215 = vcmask 261120
    %v217 = vsel %vm215, %v213, 0
    %v220 = vsel %vm215, %v214, 0
    %222 = vmatprep.subr.bf16.mxu0 0
    %223 = vmatpush1.bf16.msra.mxu0 %v179
    %224 = vmatprep.subr.bf16.mxu0 0
    %225 = vmatpush1.bf16.msra.mxu0 %v180
    %226 = vmatprep.subr.bf16.mxu0 0
    %227 = vmatpush1.bf16.msra.mxu0 0
    %228 = vmatprep.subr.bf16.mxu0 0
    %229 = vmatpush1.bf16.msra.mxu0 0
    %230 = vmatprep.subr.bf16.mxu0 0
    %231 = vmatpush1.bf16.msra.mxu0 0
    %232 = vmatprep.subr.bf16.mxu0 0
    %233 = vmatpush1.bf16.msra.mxu0 0
    %234 = vmatprep.subr.bf16.mxu0 0
    %235 = vmatpush1.bf16.msra.mxu0 0
    %236 = vmatprep.subr.bf16.mxu0 0
    %237 = vmatpush1.bf16.msra.mxu0 0
    %238 = vmatprep.subr.bf16.mxu0 0
    %239 = vmatpush1.bf16.msra.mxu0 0
    %240 = vmatprep.subr.bf16.mxu0 0
    %241 = vmatpush1.bf16.msra.mxu0 0
    %242 = vmatprep.subr.bf16.mxu0 0
    %243 = vmatpush1.bf16.msra.mxu0 0
    %244 = vmatprep.subr.bf16.mxu0 0
    %245 = vmatpush1.bf16.msra.mxu0 0
    %246 = vmatprep.subr.bf16.mxu0 0
    %247 = vmatpush1.bf16.msra.mxu0 0
    %248 = vmatprep.subr.bf16.mxu0 0
    %249 = vmatpush1.bf16.msra.mxu0 0
    %250 = vmatprep.subr.bf16.mxu0 0
    %251 = vmatpush1.bf16.msra.mxu0 0
    %252 = vmatprep.subr.bf16.mxu0 0
    %253 = vmatpush1.bf16.msra.mxu0 0
    %254 = vmatprep.mubr.bf16.mxu0 0
    %255 = vmatmul.mubr.bf16.gmra.mrb[0].mxu0 %v217
    %v256 = vpop.f32.mrb[0].mxu0
    %v257 = vadd.f32 %v188, %v256
    %v258 = vpop.f32.mrb[0].mxu0
    %v259 = vpop.f32.mrb[0].mxu0
    %v260 = vadd.f32 %v193, %v259
    %v261 = vpop.f32.mrb[0].mxu0
    %262 = vmatprep.mubr.bf16.mxu0 0
    %263 = vmatmul.mubr.bf16.gmra.mrb[0].mxu0 %v220
    %v264 = vpop.f32.mrb[0].mxu0
    %v265 = vadd.f32 %v198, %v264
    %v266 = vpop.f32.mrb[0].mxu0
    %v267 = vpop.f32.mrb[0].mxu0
    %v268 = vadd.f32 %v203, %v267
    %v269 = vpop.f32.mrb[0].mxu0
    %270 = vdwg.mxu0
    %v271 = vmax.f32 %v257, 0.0
    %v272 = vmax.f32 %v260, 0.0
    %v273 = vmax.f32 %v265, 0.0
    %v274 = vmax.f32 %v268, 0.0
    %v275 = vld [vmem:[%s5] sm:$0xff]
    %v276 = vld [vmem:[%s5 + $0x8] sm:$0xff]
    %v277 = vld [vmem:[%s5 + $0x10] sm:$0xff]
    %v278 = vld [vmem:[%s5 + $0x18] sm:$0xff]
    %280 = vset.pattern.permute.xlu0 0
    %281 = vperm.xlu0 %280, %v275
    %v282 = vpop.permute.xlu0 %281
    %285 = vset.pattern.permute.xlu0 0
    %286 = vperm.xlu0 %285, %v276
    %v287 = vpop.permute.xlu0 %286
    %290 = vset.pattern.permute.xlu0 0
    %291 = vperm.xlu0 %290, %v277
    %v292 = vpop.permute.xlu0 %291
    %295 = vset.pattern.permute.xlu0 0
    %296 = vperm.xlu0 %295, %v278
    %v297 = vpop.permute.xlu0 %296
    %v299 = vmul.f32 %v271, %v282
    %v300 = vmul.f32 %v272, %v287
    %v301 = vmul.f32 %v273, %v292
    %v302 = vmul.f32 %v274, %v297
    %v303 = vadd.f32 %v299, %v300
    %v304 = vadd.f32 %v303, %v301
    %v305 = vadd.f32 %v304, %v302
    %v306 = vrot.slane %v305, 4
    %v307 = vadd.f32 %v305, %v306
    %v308 = vrot.slane %v307, 2
    %v309 = vadd.f32 %v307, %v308
    %v310 = vrot.slane %v309, 1
    %v311 = vadd.f32 %v309, %v310
    %s312 = sld [smem:[#allocation2]]
    %v313 = vstv %s312
    %v314 = vadd.f32 %v311, %v313
    %315 = vst [vmem:[#allocation3] sm:$0x1] %v314
    // Predicated region
    $region30: #{tpu_custom_call.1} parent=1 // pred_check
      _
    $region31: #{tpu_custom_call.1} parent=1 // pred_check_branch
      %317 = sbr.rel (0) target = $region33
    $region32: #{tpu_custom_call.1} parent=1 // pred_region
      %s319 = ssub.s32 16, 16
      %320 = vsyncadd [#allocation4], %s319
      %s322 = sshll.u32 [#allocation3], 4
      %s323 = int_to_ptr.vmem [resolvable:$true] %s322
      %325 = dma.vmem_to_hbm [thread:$0]  %s323, 16, %s7, [#allocation4]
    $region33: #{tpu_custom_call.1} parent=1 // pred_fallthru
      _
    // Predicated region
    $region34: #{tpu_custom_call.1} parent=1 // pred_check
      _
    $region35: #{tpu_custom_call.1} parent=1 // pred_check_branch
      %327 = sbr.rel (0) target = $region37
    $region36: #{tpu_custom_call.1} parent=1 // pred_region
      %328 = dma.done [#allocation4], 16
    $region37: #{tpu_custom_call.1} parent=1 // pred_fallthru
      _
    %329 = vsyncpa [#allocation4], 1

</llo_original>
